<compile_context>
chip_gen: v7x
topology: tpu7x:2x2x1
jax: 0.10.0
libtpu: 0.0.40
codegen_flags: <defaults>
</compile_context>

<pallas_src>
import functools

import jax
import jax.numpy as jnp
from jax.experimental import pallas as pl
from jax.experimental.pallas import tpu as pltpu


def _round_up(x, m):
    return ((x + m - 1) // m) * m


def pinn_mlp_kernel(xt_ref, w1t_ref, b1t_ref, w2t_ref, b2t_ref, w3c_ref, b3_ref,
                    yt_ref, ssq_ref, *, n_valid):
    """Per-tile MLP in transposed layout (batch on the lane axis).

    xt_ref:  (d_in, T)   input tile; normalization already folded into W1/b1
    w1t_ref: (H, d_in)   b1t_ref: (H, 1)
    w2t_ref: (H, H)      b2t_ref: (H, 1)
    w3c_ref: (H, 1)      b3_ref:  (1, 1)
    yt_ref:  (1, T)      un-normalized network output (lane-dense)
    ssq_ref: (1, 8, 128) broadcast partial sum(y^2) for this tile
    """
    d_in = w1t_ref.shape[1]
    tile = xt_ref.shape[1]

    # Layer 1 (K = d_in = 2): outer-product FMAs on the VPU; the MXU would be
    # <1% utilized here and cost a push/pop round-trip.
    h = b1t_ref[...]                                   # (H, 1) -> broadcasts
    for k in range(d_in):                              # static, tiny
        h = h + w1t_ref[:, k:k + 1] * xt_ref[k:k + 1, :]
    h = jnp.sin(h)                                     # (H, T)

    # Layer 2 (H x H): the only matmul worth the MXU; batch stays on lanes.
    h = jnp.dot(w2t_ref[...], h, preferred_element_type=jnp.float32) \
        + b2t_ref[...]
    h = jnp.sin(h)                                     # (H, T)

    # Layer 3 (N_out = 1): VPU multiply + sublane reduce, skip the MXU.
    y = jnp.sum(w3c_ref[...] * h, axis=0, keepdims=True) + b3_ref[...]  # (1, T)

    # Zero the padded batch columns so they do not pollute the global L2 norm.
    if n_valid is not None:
        col = (jax.lax.broadcasted_iota(jnp.int32, (1, tile), 1)
               + pl.program_id(0) * tile)
        y = jnp.where(col < n_valid, y, 0.0)

    yt_ref[...] = y
    ssq_ref[...] = jnp.full(ssq_ref.shape, jnp.sum(y * y), dtype=jnp.float32)


def pinn_scale_kernel(ssq_ref, yt_ref, noise_ref, out_ref):
    """out = y * rsqrt(sum(y^2)) + 0.1 * noise, on lane-dense tiles."""
    # NOTE: no epsilon guard, to match the PyTorch module exactly.
    inv = jax.lax.rsqrt(ssq_ref[...])                  # (1, 1), EUP slot
    out_ref[...] = yt_ref[...] * inv + 0.1 * noise_ref[...]


def pinn_forward(x, lb, ub, params, noise, *, tile_n=None):
    """Full PINN forward: normalize -> [Linear, sin]*2 -> Linear -> global
    L2-normalize -> + 0.1*noise.  Weights are (in, out); biases are (1, out).
    """
    (w1, b1), (w2, b2), (w3, b3) = params
    n, d_in = x.shape
    hidden = w1.shape[1]
    d_out = w3.shape[1]
    assert d_out == 1, "kernel specializes the scalar (psi) output layer"

    # ---- fold (x - lb)/(ub - lb) = x*s + t into layer 1 (done once, outside) --
    s = 1.0 / (ub - lb)                                # (1, d_in)
    t = -lb * s                                        # (1, d_in)
    w1f = w1 * jnp.transpose(s)                        # scale rows of W1
    b1f = t @ w1 + b1                                  # (1, H)

    # ---- transposed, lane-dense layout (batch on the 128-lane axis) ----------
    w1t = jnp.transpose(w1f).astype(jnp.float32)       # (H, d_in)
    b1t = jnp.transpose(b1f).astype(jnp.float32)       # (H, 1)
    w2t = jnp.transpose(w2).astype(jnp.float32)        # (H, H)
    b2t = jnp.transpose(b2).astype(jnp.float32)        # (H, 1)
    w3c = w3.astype(jnp.float32)                       # (H, 1)
    b3s = jnp.reshape(b3, (1, 1)).astype(jnp.float32)  # (1, 1)

    if tile_n is None:
        tile_n = min(2048, _round_up(n, 128))          # lane-dense batch tile
    else:
        tile_n = _round_up(tile_n, 128)
    n_pad = _round_up(n, tile_n)
    grid = n_pad // tile_n

    xt = jnp.transpose(x).astype(jnp.float32)          # (d_in, n)
    noiset = jnp.transpose(noise).astype(jnp.float32)  # (1, n)
    if n_pad != n:
        xt = jnp.pad(xt, ((0, 0), (0, n_pad - n)))
        noiset = jnp.pad(noiset, ((0, 0), (0, n_pad - n)))

    def wspec(shape):
        return pl.BlockSpec(shape, lambda i: (0, 0))   # replicated weights

    mlp_kernel = functools.partial(
        pinn_mlp_kernel, n_valid=(n if n_pad != n else None))

    cost = pl.CostEstimate(
        flops=int(2 * n * (d_in * hidden + hidden * hidden + hidden)),
        transcendentals=int(2 * n * hidden),
        bytes_accessed=int(4 * (xt.size + noiset.size + w1t.size + b1t.size
                                + w2t.size + b2t.size + w3c.size + 1
                                + 2 * n_pad)),
    )

    # ---- pass A: per-tile MLP + partial sum(y^2) -----------------------------
    y_t, ssq_parts = pl.pallas_call(
        mlp_kernel,
        out_shape=(
            jax.ShapeDtypeStruct((1, n_pad), jnp.float32),
            jax.ShapeDtypeStruct((grid, 8, 128), jnp.float32),
        ),
        grid_spec=pltpu.PrefetchScalarGridSpec(
            num_scalar_prefetch=0,
            grid=(grid,),
            in_specs=[
                pl.BlockSpec((d_in, tile_n), lambda i: (0, i)),
                wspec((hidden, d_in)),
                wspec((hidden, 1)),
                wspec((hidden, hidden)),
                wspec((hidden, 1)),
                wspec((hidden, 1)),
                wspec((1, 1)),
            ],
            out_specs=(
                pl.BlockSpec((1, tile_n), lambda i: (0, i)),
                pl.BlockSpec((1, 8, 128), lambda i: (i, 0, 0)),
            ),
        ),
        compiler_params=pltpu.CompilerParams(
            dimension_semantics=("parallel",)),
        cost_estimate=cost,
    )(xt, w1t, b1t, w2t, b2t, w3c, b3s)

    # Tiny cross-tile reduction of the per-tile partial sums (G scalars).
    ssq_total = jnp.sum(ssq_parts[:, 0, 0]).reshape(1, 1)

    # ---- pass B: global L2 scale + additive noise ----------------------------
    out_t = pl.pallas_call(
        pinn_scale_kernel,
        out_shape=jax.ShapeDtypeStruct((1, n_pad), jnp.float32),
        grid_spec=pltpu.PrefetchScalarGridSpec(
            num_scalar_prefetch=0,
            grid=(grid,),
            in_specs=[
                pl.BlockSpec((1, 1), lambda i: (0, 0)),
                pl.BlockSpec((1, tile_n), lambda i: (0, i)),
                pl.BlockSpec((1, tile_n), lambda i: (0, i)),
            ],
            out_specs=pl.BlockSpec((1, tile_n), lambda i: (0, i)),
        ),
        compiler_params=pltpu.CompilerParams(
            dimension_semantics=("parallel",)),
    )(ssq_total, y_t, noiset)

    return jnp.transpose(out_t[:, :n])                 # (n, 1)


def xavier_normal(key, fan_in, fan_out):
    std = (2.0 / (fan_in + fan_out)) ** 0.5
    return std * jax.random.normal(key, (fan_in, fan_out), dtype=jnp.float32)


if __name__ == "__main__":
    # layers = [2, 32, 32, 1]  (2D GPE PINN: (x, y) -> psi)
    layer_sizes = [2, 32, 32, 1]
    batch = 64

    key = jax.random.PRNGKey(0)
    k_x, k_noise, k_w1, k_w2, k_w3 = jax.random.split(key, 5)

    # Domain bounds and inputs
    lb = jnp.array([[-1.0, -1.0]], dtype=jnp.float32)
    ub = jnp.array([[1.0, 1.0]], dtype=jnp.float32)
    x = jax.random.uniform(k_x, (batch, layer_sizes[0]),
                           minval=-1.0, maxval=1.0, dtype=jnp.float32)

    # Deterministic Xavier-normal weights, bias = 0.01 (as in init_weights)
    params = []
    for kw, (fi, fo) in zip((k_w1, k_w2, k_w3),
                            zip(layer_sizes[:-1], layer_sizes[1:])):
        w = xavier_normal(kw, fi, fo)
        b = jnp.full((1, fo), 0.01, dtype=jnp.float32)
        params.append((w, b))

    # Deterministic Gaussian perturbation (torch.randn_like equivalent,
    # generated outside and passed in).
    noise = jax.random.normal(k_noise, (batch, layer_sizes[-1]),
                              dtype=jnp.float32)

    out = pinn_forward(x, lb, ub, params, noise)
    jax.block_until_ready(out)

    # Reference check in plain JAX (same math as the PyTorch forward).
    h = (x - lb) / (ub - lb)
    for i, (w, b) in enumerate(params):
        h = h @ w + b
        if i < len(params) - 1:
            h = jnp.sin(h)
    h = h / jnp.sqrt(jnp.sum(h * h))
    ref = h + 0.1 * noise
    assert out.shape == ref.shape, "shape mismatch vs JAX reference"
    assert jnp.allclose(out, ref, atol=1e-4, rtol=1e-4), \
        "mismatch vs JAX reference"

    print("KERNEL_OK")
</pallas_src>

<mosaic_0001>
module attributes {stable_mosaic.version = 11 : i64} {
  func.func @pinn_mlp_kernel(%arg0: i32, %arg1: memref<2x128xf32, #tpu.memory_space<vmem>>, %arg2: memref<32x2xf32, #tpu.memory_space<vmem>>, %arg3: memref<32x1xf32, #tpu.memory_space<vmem>>, %arg4: memref<32x32xf32, #tpu.memory_space<vmem>>, %arg5: memref<32x1xf32, #tpu.memory_space<vmem>>, %arg6: memref<32x1xf32, #tpu.memory_space<vmem>>, %arg7: memref<1x1xf32, #tpu.memory_space<vmem>>, %arg8: memref<1x128xf32, #tpu.memory_space<vmem>>, %arg9: memref<1x8x128xf32, #tpu.memory_space<vmem>>) attributes {dimension_semantics = [#tpu.dimension_semantics<parallel>], iteration_bounds = array<i64: 1>, scalar_prefetch = 0 : i64, scratch_operands = 0 : i64, tpu.core_type = #tpu.core_type<tc>, window_params = [{transform_indices = @transform_0, window_bounds = array<i64: 2, 128>}, {pipeline_mode = #tpu.pipeline_mode<synchronous>, transform_indices = @transform_1, window_bounds = array<i64: 32, 2>}, {pipeline_mode = #tpu.pipeline_mode<synchronous>, transform_indices = @transform_2, window_bounds = array<i64: 32, 1>}, {pipeline_mode = #tpu.pipeline_mode<synchronous>, transform_indices = @transform_3, window_bounds = array<i64: 32, 32>}, {pipeline_mode = #tpu.pipeline_mode<synchronous>, transform_indices = @transform_4, window_bounds = array<i64: 32, 1>}, {pipeline_mode = #tpu.pipeline_mode<synchronous>, transform_indices = @transform_5, window_bounds = array<i64: 32, 1>}, {pipeline_mode = #tpu.pipeline_mode<synchronous>, transform_indices = @transform_6, window_bounds = array<i64: 1, 1>}, {transform_indices = @transform_7, window_bounds = array<i64: 1, 128>}, {transform_indices = @transform_8, window_bounds = array<i64: 1, 8, 128>}]} {
    %c0 = arith.constant 0 : index
    %c0_0 = arith.constant 0 : index
    %0 = vector.load %arg3[%c0, %c0_0] : memref<32x1xf32, #tpu.memory_space<vmem>>, vector<32x1xf32>
    %c0_1 = arith.constant 0 : index
    %c0_2 = arith.constant 0 : index
    %1 = vector.load %arg2[%c0_1, %c0_2] : memref<32x2xf32, #tpu.memory_space<vmem>>, vector<32x1xf32>
    %c0_3 = arith.constant 0 : index
    %c0_4 = arith.constant 0 : index
    %2 = vector.load %arg1[%c0_3, %c0_4] : memref<2x128xf32, #tpu.memory_space<vmem>>, vector<1x128xf32>
    %3 = vector.broadcast %1 : vector<32x1xf32> to vector<32x128xf32>
    %4 = vector.broadcast %2 : vector<1x128xf32> to vector<32x128xf32>
    %5 = arith.mulf %3, %4 : vector<32x128xf32>
    %6 = vector.broadcast %0 : vector<32x1xf32> to vector<32x128xf32>
    %7 = arith.addf %6, %5 : vector<32x128xf32>
    %c0_5 = arith.constant 0 : index
    %c1 = arith.constant 1 : index
    %8 = vector.load %arg2[%c0_5, %c1] : memref<32x2xf32, #tpu.memory_space<vmem>>, vector<32x1xf32>
    %c1_6 = arith.constant 1 : index
    %c0_7 = arith.constant 0 : index
    %9 = vector.load %arg1[%c1_6, %c0_7] : memref<2x128xf32, #tpu.memory_space<vmem>>, vector<1x128xf32>
    %10 = vector.broadcast %8 : vector<32x1xf32> to vector<32x128xf32>
    %11 = vector.broadcast %9 : vector<1x128xf32> to vector<32x128xf32>
    %12 = arith.mulf %10, %11 : vector<32x128xf32>
    %13 = arith.addf %7, %12 : vector<32x128xf32>
    %14 = math.sin %13 : vector<32x128xf32>
    %c0_8 = arith.constant 0 : index
    %c0_9 = arith.constant 0 : index
    %15 = vector.load %arg4[%c0_8, %c0_9] : memref<32x32xf32, #tpu.memory_space<vmem>>, vector<32x32xf32>
    %cst = arith.constant dense<0.000000e+00> : vector<32x128xf32>
    %16 = tpu.matmul %15, %14, %cst {dimension_numbers = #tpu.dot_dimension_numbers<[1], [0], [0], [1], [0, 0, 1, 1], [], []>} : vector<32x32xf32>, vector<32x128xf32>, vector<32x128xf32> -> vector<32x128xf32>
    %c0_10 = arith.constant 0 : index
    %c0_11 = arith.constant 0 : index
    %17 = vector.load %arg5[%c0_10, %c0_11] : memref<32x1xf32, #tpu.memory_space<vmem>>, vector<32x1xf32>
    %18 = vector.broadcast %17 : vector<32x1xf32> to vector<32x128xf32>
    %19 = arith.addf %16, %18 : vector<32x128xf32>
    %20 = math.sin %19 : vector<32x128xf32>
    %c0_12 = arith.constant 0 : index
    %c0_13 = arith.constant 0 : index
    %21 = vector.load %arg6[%c0_12, %c0_13] : memref<32x1xf32, #tpu.memory_space<vmem>>, vector<32x1xf32>
    %22 = vector.broadcast %21 : vector<32x1xf32> to vector<32x128xf32>
    %23 = arith.mulf %22, %20 : vector<32x128xf32>
    %cst_14 = arith.constant dense<0.000000e+00> : vector<128xf32>
    %24 = vector.multi_reduction <add>, %23, %cst_14 [0] : vector<32x128xf32> to vector<128xf32>
    %25 = vector.shape_cast %24 : vector<128xf32> to vector<1x128xf32>
    %c0_15 = arith.constant 0 : index
    %c0_16 = arith.constant 0 : index
    %26 = vector.load %arg7[%c0_15, %c0_16] : memref<1x1xf32, #tpu.memory_space<vmem>>, vector<1x1xf32>
    %27 = vector.broadcast %26 : vector<1x1xf32> to vector<1x128xf32>
    %28 = arith.addf %25, %27 : vector<1x128xf32>
    %29 = tpu.iota {dimensions = array<i32: 1>} : vector<1x128xi32>
    %c128_i32 = arith.constant 128 : i32
    %30 = arith.muli %arg0, %c128_i32 : i32
    %31 = vector.broadcast %30 : i32 to vector<1x128xi32>
    %32 = arith.addi %29, %31 : vector<1x128xi32>
    %c64_i32 = arith.constant 64 : i32
    %33 = vector.broadcast %c64_i32 : i32 to vector<1x128xi32>
    %34 = arith.cmpi slt, %32, %33 : vector<1x128xi32>
    %cst_17 = arith.constant 0.000000e+00 : f32
    %35 = vector.broadcast %cst_17 : f32 to vector<1x128xf32>
    %36 = arith.select %34, %28, %35 : vector<1x128xi1>, vector<1x128xf32>
    %c0_18 = arith.constant 0 : index
    %c0_19 = arith.constant 0 : index
    %37 = vector.load %arg8[%c0_18, %c0_19] : memref<1x128xf32, #tpu.memory_space<vmem>>, vector<1x128xf32>
    tpu.vector_store %arg8[%c0_18, %c0_19], %36 {strides = array<i32>} : memref<1x128xf32, #tpu.memory_space<vmem>>, vector<1x128xf32>,
    %38 = arith.mulf %36, %36 : vector<1x128xf32>
    %39 = vector.shape_cast %38 : vector<1x128xf32> to vector<1x1x128xf32>
    %cst_20 = arith.constant dense<0.000000e+00> : vector<1xf32>
    %40 = vector.multi_reduction <add>, %39, %cst_20 [1, 2] : vector<1x1x128xf32> to vector<1xf32>
    %41 = vector.shape_cast %40 : vector<1xf32> to vector<1x1x1xf32>
    %42 = vector.extract %41[0, 0, 0] : f32 from vector<1x1x1xf32>
    %43 = vector.broadcast %42 : f32 to vector<1x8x128xf32>
    %c0_21 = arith.constant 0 : index
    %c0_22 = arith.constant 0 : index
    %c0_23 = arith.constant 0 : index
    %44 = vector.load %arg9[%c0_21, %c0_22, %c0_23] : memref<1x8x128xf32, #tpu.memory_space<vmem>>, vector<1x8x128xf32>
    tpu.vector_store %arg9[%c0_21, %c0_22, %c0_23], %43 {strides = array<i32>} : memref<1x8x128xf32, #tpu.memory_space<vmem>>, vector<1x8x128xf32>,
    return
  }
  func.func @transform_0(%arg0: i32) -> (i32, i32) {
    %c0_i32 = arith.constant 0 : i32
    %c0_i32_0 = arith.constant 0 : i32
    return %c0_i32, %arg0 : i32, i32
  }
  func.func @transform_1(%arg0: i32) -> (i32, i32) {
    %c0_i32 = arith.constant 0 : i32
    %c0_i32_0 = arith.constant 0 : i32
    %c0_i32_1 = arith.constant 0 : i32
    return %c0_i32, %c0_i32_0 : i32, i32
  }
  func.func @transform_2(%arg0: i32) -> (i32, i32) {
    %c0_i32 = arith.constant 0 : i32
    %c0_i32_0 = arith.constant 0 : i32
    %c0_i32_1 = arith.constant 0 : i32
    return %c0_i32, %c0_i32_0 : i32, i32
  }
  func.func @transform_3(%arg0: i32) -> (i32, i32) {
    %c0_i32 = arith.constant 0 : i32
    %c0_i32_0 = arith.constant 0 : i32
    %c0_i32_1 = arith.constant 0 : i32
    return %c0_i32, %c0_i32_0 : i32, i32
  }
  func.func @transform_4(%arg0: i32) -> (i32, i32) {
    %c0_i32 = arith.constant 0 : i32
    %c0_i32_0 = arith.constant 0 : i32
    %c0_i32_1 = arith.constant 0 : i32
    return %c0_i32, %c0_i32_0 : i32, i32
  }
  func.func @transform_5(%arg0: i32) -> (i32, i32) {
    %c0_i32 = arith.constant 0 : i32
    %c0_i32_0 = arith.constant 0 : i32
    %c0_i32_1 = arith.constant 0 : i32
    return %c0_i32, %c0_i32_0 : i32, i32
  }
  func.func @transform_6(%arg0: i32) -> (i32, i32) {
    %c0_i32 = arith.constant 0 : i32
    %c0_i32_0 = arith.constant 0 : i32
    %c0_i32_1 = arith.constant 0 : i32
    return %c0_i32, %c0_i32_0 : i32, i32
  }
  func.func @transform_7(%arg0: i32) -> (i32, i32) {
    %c0_i32 = arith.constant 0 : i32
    %c0_i32_0 = arith.constant 0 : i32
    return %c0_i32, %arg0 : i32, i32
  }
  func.func @transform_8(%arg0: i32) -> (i32, i32, i32) {
    %c0_i32 = arith.constant 0 : i32
    %c0_i32_0 = arith.constant 0 : i32
    %c0_i32_1 = arith.constant 0 : i32
    return %arg0, %c0_i32, %c0_i32_0 : i32, i32, i32
  }
}

</mosaic_0001>

<llo_original>
// kernel: tpu_custom_call.1
$region0: #{tpu_custom_call.1}
  #allocation0 [shape = 'u32[]', space=smem, size = 0x4, offset = 0x4, fixed_abs, tag = 'smem constant byte address 0x4 - core index']
  #allocation1 [shape = 'u32[144,128]{1,0:T(1,128)}', space=vmem, size = 0x12000, scoped, tag = 'internal scratch']
  #allocation2 [shape = 'f32[1,1]{1,0:T(1,128)S(1)}', space=vmem, size = 0x200, scoped, tag = 'scoped memory for tpu_custom_call.1']
  %s0 = inlined_call_operand.vmem [shape: f32[2,128], index: 0, kind: input, shape index: {}]
  %s1 = inlined_call_operand.vmem [shape: f32[32,2], index: 1, kind: input, shape index: {}]
  %s2 = inlined_call_operand.vmem [shape: f32[32,1], index: 2, kind: input, shape index: {}]
  %s3 = inlined_call_operand.vmem [shape: f32[32,32], index: 3, kind: input, shape index: {}]
  %s4 = inlined_call_operand.vmem [shape: f32[32,1], index: 4, kind: input, shape index: {}]
  %s5 = inlined_call_operand.vmem [shape: f32[32,1], index: 5, kind: input, shape index: {}]
  %s6 = inlined_call_operand.<no memory space> [shape: f32[1,1], index: 6, kind: input, shape index: {}]
  %s7 = inlined_call_operand.hbm [shape: f32[1,128], index: 7, kind: output, shape index: {0}]
  %s8 = inlined_call_operand.hbm [shape: f32[1,8,128], index: 8, kind: output, shape index: {1}]
  %9 = xla_tuple %s7, %s8
  %s10 = sld [smem:[#allocation0]]
  $region46: #{tpu_custom_call.1} parent=0
    _
  %s12 = ssub.s32 1, %s10
  %s13 = scalar_select 0, %s12, %s10
  %v14 = vstv %s6
  %15 = vst [vmem:[#allocation2] sm:$0x1] %v14
  $region1: #{tpu_custom_call.1} parent=0
    #allocation3 [shape = 'u8[512]{0}', space=vmem, size = 0x400, scoped, tag = 'output window, operand 0, single buffered']
    #allocation4 [shape = 's32[1]{0}', space=sflag, size = 0x4, scoped, tag = 'scoped memory for tpu_custom_call.1']
    #allocation5 [shape = 'u8[4096]{0}', space=vmem, size = 0x1000, scoped, tag = 'output window, operand 1, single buffered']
    #allocation6 [shape = 's32[1]{0}', space=sflag, size = 0x4, scoped, tag = 'scoped memory for tpu_custom_call.1']
    %16 = vsyncpa [#allocation4], 0
    %17 = vsyncpa [#allocation6], 0
    // Predicated region
    $region2: #{tpu_custom_call.1} parent=1 // pred_check
      _
    $region3: #{tpu_custom_call.1} parent=1 // pred_check_branch
      %19 = sbr.rel (0) target = $region5
    $region4: #{tpu_custom_call.1} parent=1 // pred_region
      _
    $region5: #{tpu_custom_call.1} parent=1 // pred_fallthru
      _
    // Predicated region
    $region6: #{tpu_custom_call.1} parent=1 // pred_check
      _
    $region7: #{tpu_custom_call.1} parent=1 // pred_check_branch
      %21 = sbr.rel (0) target = $region9
    $region8: #{tpu_custom_call.1} parent=1 // pred_region
      _
    $region9: #{tpu_custom_call.1} parent=1 // pred_fallthru
      _
    // Predicated region
    $region10: #{tpu_custom_call.1} parent=1 // pred_check
      _
    $region11: #{tpu_custom_call.1} parent=1 // pred_check_branch
      %23 = sbr.rel (0) target = $region13
    $region12: #{tpu_custom_call.1} parent=1 // pred_region
      _
    $region13: #{tpu_custom_call.1} parent=1 // pred_fallthru
      _
    // Predicated region
    $region14: #{tpu_custom_call.1} parent=1 // pred_check
      _
    $region15: #{tpu_custom_call.1} parent=1 // pred_check_branch
      %25 = sbr.rel (0) target = $region17
    $region16: #{tpu_custom_call.1} parent=1 // pred_region
      _
    $region17: #{tpu_custom_call.1} parent=1 // pred_fallthru
      _
    // Predicated region
    $region18: #{tpu_custom_call.1} parent=1 // pred_check
      _
    $region19: #{tpu_custom_call.1} parent=1 // pred_check_branch
      %27 = sbr.rel (0) target = $region21
    $region20: #{tpu_custom_call.1} parent=1 // pred_region
      _
    $region21: #{tpu_custom_call.1} parent=1 // pred_fallthru
      _
    // Predicated region
    $region22: #{tpu_custom_call.1} parent=1 // pred_check
      _
    $region23: #{tpu_custom_call.1} parent=1 // pred_check_branch
      %29 = sbr.rel (0) target = $region25
    $region24: #{tpu_custom_call.1} parent=1 // pred_region
      _
    $region25: #{tpu_custom_call.1} parent=1 // pred_fallthru
      _
    // Predicated region
    $region26: #{tpu_custom_call.1} parent=1 // pred_check
      _
    $region27: #{tpu_custom_call.1} parent=1 // pred_check_branch
      %31 = sbr.rel (0) target = $region29
    $region28: #{tpu_custom_call.1} parent=1 // pred_region
      _
    $region29: #{tpu_custom_call.1} parent=1 // pred_fallthru
      _
    %v32 = vld [vmem:[%s2] sm:$0xff]
    %v33 = vld [vmem:[%s2 + $0x8] sm:$0xff]
    %v34 = vld [vmem:[%s2 + $0x10] sm:$0xff]
    %v35 = vld [vmem:[%s2 + $0x18] sm:$0xff]
    %v36 = vld [vmem:[%s1] sm:$0xff]
    %v37 = vld [vmem:[%s1 + $0x8] sm:$0xff]
    %v38 = vld [vmem:[%s1 + $0x10] sm:$0xff]
    %v39 = vld [vmem:[%s1 + $0x18] sm:$0xff]
    %v40 = vld [vmem:[%s0] sm:$0x1]
    %42 = vset.pattern.permute.xlu0 0
    %43 = vperm.xlu0 %42, %v36
    %v44 = vpop.permute.xlu0 %43
    %47 = vset.pattern.permute.xlu0 0
    %48 = vperm.xlu0 %47, %v37
    %v49 = vpop.permute.xlu0 %48
    %52 = vset.pattern.permute.xlu0 0
    %53 = vperm.xlu0 %52, %v38
    %v54 = vpop.permute.xlu0 %53
    %57 = vset.pattern.permute.xlu0 0
    %58 = vperm.xlu0 %57, %v39
    %v59 = vpop.permute.xlu0 %58
    %v61 = vlaneseq
    %v62 = vshrl.u32 %v61, 7
    %v63 = vsub.s32 0, %v62
    %v64 = vrot.slane %v40, %v63
    %v65 = vmul.f32 %v44, %v64
    %v66 = vmul.f32 %v49, %v64
    %v67 = vmul.f32 %v54, %v64
    %v68 = vmul.f32 %v59, %v64
    %70 = vset.pattern.permute.xlu0 0
    %71 = vperm.xlu0 %70, %v32
    %v72 = vpop.permute.xlu0 %71
    %75 = vset.pattern.permute.xlu0 0
    %76 = vperm.xlu0 %75, %v33
    %v77 = vpop.permute.xlu0 %76
    %80 = vset.pattern.permute.xlu0 0
    %81 = vperm.xlu0 %80, %v34
    %v82 = vpop.permute.xlu0 %81
    %85 = vset.pattern.permute.xlu0 0
    %86 = vperm.xlu0 %85, %v35
    %v87 = vpop.permute.xlu0 %86
    %v89 = vadd.f32 %v72, %v65
    %v90 = vadd.f32 %v77, %v66
    %v91 = vadd.f32 %v82, %v67
    %v92 = vadd.f32 %v87, %v68
    %v93 = vld [vmem:[%s0 + $0x1] sm:$0x1]
    %94 = vset.pattern.permute.xlu0 1
    %95 = vperm.xlu0 %94, %v36
    %v96 = vpop.permute.xlu0 %95
    %98 = vset.pattern.permute.xlu0 1
    %99 = vperm.xlu0 %98, %v37
    %v100 = vpop.permute.xlu0 %99
    %102 = vset.pattern.permute.xlu0 1
    %103 = vperm.xlu0 %102, %v38
    %v104 = vpop.permute.xlu0 %103
    %106 = vset.pattern.permute.xlu0 1
    %107 = vperm.xlu0 %106, %v39
    %v108 = vpop.permute.xlu0 %107
    %v110 = vlaneseq
    %v111 = vshrl.u32 %v110, 7
    %v112 = vsub.s32 0, %v111
    %v113 = vrot.slane %v93, %v112
    %v114 = vmul.f32 %v96, %v113
    %v115 = vmul.f32 %v100, %v113
    %v116 = vmul.f32 %v104, %v113
    %v117 = vmul.f32 %v108, %v113
    %v118 = vadd.f32 %v89, %v114
    %v119 = vadd.f32 %v90, %v115
    %v120 = vadd.f32 %v91, %v116
    %v121 = vadd.f32 %v92, %v117
    %v122 = vand.u32 2147483647, %v118
    %vm123 = vcmp.le.f32.partialorder %v122, 0.7853982
    %vm124 = vcmp.lt.s32.totalorder %v118, 0
    %v125 = vand.u32 %v118, 2139095040
    %v126 = vshrl.u32 %v125, 23
    %v127 = vsub.s32 %v126, 127
    %v128 = vand.u32 2147483647, %v118
    %v129 = vand.u32 %v128, 8388607
    %v130 = vor.u32 %v129, 8388608
    %v131 = vsub.s32 0, %v130
    %v132 = vadd.s32 %v127, 1
    %vm133 = vcmp.gt.s32.totalorder %v132, 0
    %v134 = vsel %vm133, %v132, 0
    %v135 = vshrl.u32 %v134, 5
    %v136 = vand.u32 %v134, 31
    %v137 = vsub.s32 32, %v136
    %v138 = vshrl.u32 683565275, %v137
    %v139 = vshll.u32 683565275, %v136
    %v140 = vshrl.u32 2475754826, %v137
    %v141 = vor.u32 %v139, %v140
    %v142 = vshll.u32 2475754826, %v136
    %v143 = vshrl.u32 2131351028, %v137
    %v144 = vor.u32 %v142, %v143
    %v145 = vshll.u32 2131351028, %v136
    %v146 = vshrl.u32 2102212464, %v137
    %v147 = vor.u32 %v145, %v146
    %v148 = vshll.u32 2102212464, %v136
    %v149 = vshrl.u32 920167782, %v137
    %v150 = vor.u32 %v148, %v149
    %v151 = vshll.u32 920167782, %v136
    %v152 = vshrl.u32 1326507024, %v137
    %v153 = vor.u32 %v151, %v152
    %vm154 = vcmp.lt.s32.totalorder %v135, 1
    %vm155 = vcmp.lt.s32.totalorder %v135, 2
    %vm156 = vcmp.lt.s32.totalorder %v135, 3
    %vm157 = vcmp.lt.s32.totalorder %v135, 4
    %v158 = vsel %vm154, %v138, %v141
    %v159 = vsel %vm157, %v147, 2102212464
    %v160 = vsel %vm156, %v144, %v159
    %v161 = vsel %vm155, %v158, %v160
    %v162 = vsel %vm154, %v141, %v144
    %v163 = vsel %vm157, %v150, 920167782
    %v164 = vsel %vm156, %v147, %v163
    %v165 = vsel %vm155, %v162, %v164
    %v166 = vsel %vm154, %v144, %v147
    %v167 = vsel %vm157, %v153, 1326507024
    %v168 = vsel %vm156, %v150, %v167
    %v169 = vsel %vm155, %v166, %v168
    %v170 = vshll.u32 %v130, 8
    %v171 = vmul.u32.u64.compose %v170, %v169
    %v172 = vextract.low.u32 %v171
    %v173 = vextract.high.u32 %v171
    %v174 = vmul.u32.u64.compose %v170, %v165
    %v175 = vextract.low.u32 %v174
    %v176 = vextract.high.u32 %v174
    %v177 = vmul.u32 %v170, %v161
    %v178 = vadd.s32 %v173, %v175
    %vm179 = vc.u32 %v173, %v175
    %v180 = vadd.s32 %v176, 1
    %v181 = vsel %vm179, %v180, %v176
    %v182 = vadd.s32 %v177, %v181
    %v183 = vadd.s32 %v182, 536870912
    %v184 = vshrl.u32 %v183, 30
    %v185 = vshll.u32 %v184, 30
    %v186 = vsub.s32 %v182, %v185
    %vm187 = vcmp.lt.s32.totalorder %v186, 0
    %v188 = vsub.s32 0, %v186
    %v189 = vsel %vm187, %v188, %v186
    %v190 = vclz %v189
    %v191 = vsub.s32 %v190, 2
    %vm192 = vcmp.gt.s32.totalorder 0, %v191
    %v193 = vsel %vm192, 0, %v191
    %v194 = vsub.s32 32, %v193
    %v195 = vshll.u32 %v186, %v193
    %v196 = vshrl.u32 %v178, %v194
    %v197 = vor.u32 %v195, %v196
    %v198 = vsub.s32 4294967266, %v193
    %v199 = vadd.s32 %v198, 127
    %v200 = vshll.u32 %v199, 23
    %v201 = vor.u32 4788187, %v200
    %v202 = vand.u32 2147483647, %v201
    %v204 = vcvt.s32.f32 %v197
    %v205 = vmul.f32 %v204, %v202
    %v206 = vxor.u32 %v205, 2147483648
    %v207 = vsel %vm124, %v206, %v205
    %v208 = vsub.s32 4, %v184
    %v209 = vsel %vm124, %v208, %v184
    %v210 = vsel %vm123, %v118, %v207
    %v211 = vsel %vm123, 0, %v209
    %v212 = vcosq.f32.pop %v210
    %v213 = vsinq.f32.pop %v210
    %vm214 = vweird.f32 %v118
    %v215 = vadd.s32 %v211, 3
    %v216 = vand.u32 %v215, 3
    %vm217 = vcmp.lt.s32.totalorder %v216, 2
    %vm218 = vcmp.eq.s32.totalorder %v216, 0
    %v219 = vxor.u32 %v213, 2147483648
    %v220 = vsel %vm218, %v212, %v219
    %vm221 = vcmp.eq.s32.totalorder %v216, 2
    %v222 = vxor.u32 %v212, 2147483648
    %v223 = vsel %vm221, %v222, %v213
    %v224 = vsel %vm217, %v220, %v223
    %v225 = vsel %vm214, nan, %v224
    %v226 = vand.u32 2147483647, %v119
    %vm227 = vcmp.le.f32.partialorder %v226, 0.7853982
    %vm228 = vcmp.lt.s32.totalorder %v119, 0
    %v229 = vand.u32 %v119, 2139095040
    %v230 = vshrl.u32 %v229, 23
    %v231 = vsub.s32 %v230, 127
    %v232 = vand.u32 2147483647, %v119
    %v233 = vand.u32 %v232, 8388607
    %v234 = vor.u32 %v233, 8388608
    %v235 = vsub.s32 0, %v234
    %v236 = vadd.s32 %v231, 1
    %vm237 = vcmp.gt.s32.totalorder %v236, 0
    %v238 = vsel %vm237, %v236, 0
    %v239 = vshrl.u32 %v238, 5
    %v240 = vand.u32 %v238, 31
    %v241 = vsub.s32 32, %v240
    %v242 = vshrl.u32 683565275, %v241
    %v243 = vshll.u32 683565275, %v240
    %v244 = vshrl.u32 2475754826, %v241
    %v245 = vor.u32 %v243, %v244
    %v246 = vshll.u32 2475754826, %v240
    %v247 = vshrl.u32 2131351028, %v241
    %v248 = vor.u32 %v246, %v247
    %v249 = vshll.u32 2131351028, %v240
    %v250 = vshrl.u32 2102212464, %v241
    %v251 = vor.u32 %v249, %v250
    %v252 = vshll.u32 2102212464, %v240
    %v253 = vshrl.u32 920167782, %v241
    %v254 = vor.u32 %v252, %v253
    %v255 = vshll.u32 920167782, %v240
    %v256 = vshrl.u32 1326507024, %v241
    %v257 = vor.u32 %v255, %v256
    %vm258 = vcmp.lt.s32.totalorder %v239, 1
    %vm259 = vcmp.lt.s32.totalorder %v239, 2
    %vm260 = vcmp.lt.s32.totalorder %v239, 3
    %vm261 = vcmp.lt.s32.totalorder %v239, 4
    %v262 = vsel %vm258, %v242, %v245
    %v263 = vsel %vm261, %v251, 2102212464
    %v264 = vsel %vm260, %v248, %v263
    %v265 = vsel %vm259, %v262, %v264
    %v266 = vsel %vm258, %v245, %v248
    %v267 = vsel %vm261, %v254, 920167782
    %v268 = vsel %vm260, %v251, %v267
    %v269 = vsel %vm259, %v266, %v268
    %v270 = vsel %vm258, %v248, %v251
    %v271 = vsel %vm261, %v257, 1326507024
    %v272 = vsel %vm260, %v254, %v271
    %v273 = vsel %vm259, %v270, %v272
    %v274 = vshll.u32 %v234, 8
    %v275 = vmul.u32.u64.compose %v274, %v273
    %v276 = vextract.low.u32 %v275
    %v277 = vextract.high.u32 %v275
    %v278 = vmul.u32.u64.compose %v274, %v269
    %v279 = vextract.low.u32 %v278
    %v280 = vextract.high.u32 %v278
    %v281 = vmul.u32 %v274, %v265
    %v282 = vadd.s32 %v277, %v279
    %vm283 = vc.u32 %v277, %v279
    %v284 = vadd.s32 %v280, 1
    %v285 = vsel %vm283, %v284, %v280
    %v286 = vadd.s32 %v281, %v285
    %v287 = vadd.s32 %v286, 536870912
    %v288 = vshrl.u32 %v287, 30
    %v289 = vshll.u32 %v288, 30
    %v290 = vsub.s32 %v286, %v289
    %vm291 = vcmp.lt.s32.totalorder %v290, 0
    %v292 = vsub.s32 0, %v290
    %v293 = vsel %vm291, %v292, %v290
    %v294 = vclz %v293
    %v295 = vsub.s32 %v294, 2
    %vm296 = vcmp.gt.s32.totalorder 0, %v295
    %v297 = vsel %vm296, 0, %v295
    %v298 = vsub.s32 32, %v297
    %v299 = vshll.u32 %v290, %v297
    %v300 = vshrl.u32 %v282, %v298
    %v301 = vor.u32 %v299, %v300
    %v302 = vsub.s32 4294967266, %v297
    %v303 = vadd.s32 %v302, 127
    %v304 = vshll.u32 %v303, 23
    %v305 = vor.u32 4788187, %v304
    %v306 = vand.u32 2147483647, %v305
    %v308 = vcvt.s32.f32 %v301
    %v309 = vmul.f32 %v308, %v306
    %v310 = vxor.u32 %v309, 2147483648
    %v311 = vsel %vm228, %v310, %v309
    %v312 = vsub.s32 4, %v288
    %v313 = vsel %vm228, %v312, %v288
    %v314 = vsel %vm227, %v119, %v311
    %v315 = vsel %vm227, 0, %v313
    %v316 = vcosq.f32.pop %v314
    %v317 = vsinq.f32.pop %v314
    %vm318 = vweird.f32 %v119
    %v319 = vadd.s32 %v315, 3
    %v320 = vand.u32 %v319, 3
    %vm321 = vcmp.lt.s32.totalorder %v320, 2
    %vm322 = vcmp.eq.s32.totalorder %v320, 0
    %v323 = vxor.u32 %v317, 2147483648
    %v324 = vsel %vm322, %v316, %v323
    %vm325 = vcmp.eq.s32.totalorder %v320, 2
    %v326 = vxor.u32 %v316, 2147483648
    %v327 = vsel %vm325, %v326, %v317
    %v328 = vsel %vm321, %v324, %v327
    %v329 = vsel %vm318, nan, %v328
    %v330 = vand.u32 2147483647, %v120
    %vm331 = vcmp.le.f32.partialorder %v330, 0.7853982
    %vm332 = vcmp.lt.s32.totalorder %v120, 0
    %v333 = vand.u32 %v120, 2139095040
    %v334 = vshrl.u32 %v333, 23
    %v335 = vsub.s32 %v334, 127
    %v336 = vand.u32 2147483647, %v120
    %v337 = vand.u32 %v336, 8388607
    %v338 = vor.u32 %v337, 8388608
    %v339 = vsub.s32 0, %v338
    %v340 = vadd.s32 %v335, 1
    %vm341 = vcmp.gt.s32.totalorder %v340, 0
    %v342 = vsel %vm341, %v340, 0
    %v343 = vshrl.u32 %v342, 5
    %v344 = vand.u32 %v342, 31
    %v345 = vsub.s32 32, %v344
    %v346 = vshrl.u32 683565275, %v345
    %v347 = vshll.u32 683565275, %v344
    %v348 = vshrl.u32 2475754826, %v345
    %v349 = vor.u32 %v347, %v348
    %v350 = vshll.u32 2475754826, %v344
    %v351 = vshrl.u32 2131351028, %v345
    %v352 = vor.u32 %v350, %v351
    %v353 = vshll.u32 2131351028, %v344
    %v354 = vshrl.u32 2102212464, %v345
    %v355 = vor.u32 %v353, %v354
    %v356 = vshll.u32 2102212464, %v344
    %v357 = vshrl.u32 920167782, %v345
    %v358 = vor.u32 %v356, %v357
    %v359 = vshll.u32 920167782, %v344
    %v360 = vshrl.u32 1326507024, %v345
    %v361 = vor.u32 %v359, %v360
    %vm362 = vcmp.lt.s32.totalorder %v343, 1
    %vm363 = vcmp.lt.s32.totalorder %v343, 2
    %vm364 = vcmp.lt.s32.totalorder %v343, 3
    %vm365 = vcmp.lt.s32.totalorder %v343, 4
    %v366 = vsel %vm362, %v346, %v349
    %v367 = vsel %vm365, %v355, 2102212464
    %v368 = vsel %vm364, %v352, %v367
    %v369 = vsel %vm363, %v366, %v368
    %v370 = vsel %vm362, %v349, %v352
    %v371 = vsel %vm365, %v358, 920167782
    %v372 = vsel %vm364, %v355, %v371
    %v373 = vsel %vm363, %v370, %v372
    %v374 = vsel %vm362, %v352, %v355
    %v375 = vsel %vm365, %v361, 1326507024
    %v376 = vsel %vm364, %v358, %v375
    %v377 = vsel %vm363, %v374, %v376
    %v378 = vshll.u32 %v338, 8
    %v379 = vmul.u32.u64.compose %v378, %v377
    %v380 = vextract.low.u32 %v379
    %v381 = vextract.high.u32 %v379
    %v382 = vmul.u32.u64.compose %v378, %v373
    %v383 = vextract.low.u32 %v382
    %v384 = vextract.high.u32 %v382
    %v385 = vmul.u32 %v378, %v369
    %v386 = vadd.s32 %v381, %v383
    %vm387 = vc.u32 %v381, %v383
    %v388 = vadd.s32 %v384, 1
    %v389 = vsel %vm387, %v388, %v384
    %v390 = vadd.s32 %v385, %v389
    %v391 = vadd.s32 %v390, 536870912
    %v392 = vshrl.u32 %v391, 30
    %v393 = vshll.u32 %v392, 30
    %v394 = vsub.s32 %v390, %v393
    %vm395 = vcmp.lt.s32.totalorder %v394, 0
    %v396 = vsub.s32 0, %v394
    %v397 = vsel %vm395, %v396, %v394
    %v398 = vclz %v397
    %v399 = vsub.s32 %v398, 2
    %vm400 = vcmp.gt.s32.totalorder 0, %v399
    %v401 = vsel %vm400, 0, %v399
    %v402 = vsub.s32 32, %v401
    %v403 = vshll.u32 %v394, %v401
    %v404 = vshrl.u32 %v386, %v402
    %v405 = vor.u32 %v403, %v404
    %v406 = vsub.s32 4294967266, %v401
    %v407 = vadd.s32 %v406, 127
    %v408 = vshll.u32 %v407, 23
    %v409 = vor.u32 4788187, %v408
    %v410 = vand.u32 2147483647, %v409
    %v412 = vcvt.s32.f32 %v405
    %v413 = vmul.f32 %v412, %v410
    %v414 = vxor.u32 %v413, 2147483648
    %v415 = vsel %vm332, %v414, %v413
    %v416 = vsub.s32 4, %v392
    %v417 = vsel %vm332, %v416, %v392
    %v418 = vsel %vm331, %v120, %v415
    %v419 = vsel %vm331, 0, %v417
    %v420 = vcosq.f32.pop %v418
    %v421 = vsinq.f32.pop %v418
    %vm422 = vweird.f32 %v120
    %v423 = vadd.s32 %v419, 3
    %v424 = vand.u32 %v423, 3
    %vm425 = vcmp.lt.s32.totalorder %v424, 2
    %vm426 = vcmp.eq.s32.totalorder %v424, 0
    %v427 = vxor.u32 %v421, 2147483648
    %v428 = vsel %vm426, %v420, %v427
    %vm429 = vcmp.eq.s32.totalorder %v424, 2
    %v430 = vxor.u32 %v420, 2147483648
    %v431 = vsel %vm429, %v430, %v421
    %v432 = vsel %vm425, %v428, %v431
    %v433 = vsel %vm422, nan, %v432
    %v434 = vand.u32 2147483647, %v121
    %vm435 = vcmp.le.f32.partialorder %v434, 0.7853982
    %vm436 = vcmp.lt.s32.totalorder %v121, 0
    %v437 = vand.u32 %v121, 2139095040
    %v438 = vshrl.u32 %v437, 23
    %v439 = vsub.s32 %v438, 127
    %v440 = vand.u32 2147483647, %v121
    %v441 = vand.u32 %v440, 8388607
    %v442 = vor.u32 %v441, 8388608
    %v443 = vsub.s32 0, %v442
    %v444 = vadd.s32 %v439, 1
    %vm445 = vcmp.gt.s32.totalorder %v444, 0
    %v446 = vsel %vm445, %v444, 0
    %v447 = vshrl.u32 %v446, 5
    %v448 = vand.u32 %v446, 31
    %v449 = vsub.s32 32, %v448
    %v450 = vshrl.u32 683565275, %v449
    %v451 = vshll.u32 683565275, %v448
    %v452 = vshrl.u32 2475754826, %v449
    %v453 = vor.u32 %v451, %v452
    %v454 = vshll.u32 2475754826, %v448
    %v455 = vshrl.u32 2131351028, %v449
    %v456 = vor.u32 %v454, %v455
    %v457 = vshll.u32 2131351028, %v448
    %v458 = vshrl.u32 2102212464, %v449
    %v459 = vor.u32 %v457, %v458
    %v460 = vshll.u32 2102212464, %v448
    %v461 = vshrl.u32 920167782, %v449
    %v462 = vor.u32 %v460, %v461
    %v463 = vshll.u32 920167782, %v448
    %v464 = vshrl.u32 1326507024, %v449
    %v465 = vor.u32 %v463, %v464
    %vm466 = vcmp.lt.s32.totalorder %v447, 1
    %vm467 = vcmp.lt.s32.totalorder %v447, 2
    %vm468 = vcmp.lt.s32.totalorder %v447, 3
    %vm469 = vcmp.lt.s32.totalorder %v447, 4
    %v470 = vsel %vm466, %v450, %v453
    %v471 = vsel %vm469, %v459, 2102212464
    %v472 = vsel %vm468, %v456, %v471
    %v473 = vsel %vm467, %v470, %v472
    %v474 = vsel %vm466, %v453, %v456
    %v475 = vsel %vm469, %v462, 920167782
    %v476 = vsel %vm468, %v459, %v475
    %v477 = vsel %vm467, %v474, %v476
    %v478 = vsel %vm466, %v456, %v459
    %v479 = vsel %vm469, %v465, 1326507024
    %v480 = vsel %vm468, %v462, %v479
    %v481 = vsel %vm467, %v478, %v480
    %v482 = vshll.u32 %v442, 8
    %v483 = vmul.u32.u64.compose %v482, %v481
    %v484 = vextract.low.u32 %v483
    %v485 = vextract.high.u32 %v483
    %v486 = vmul.u32.u64.compose %v482, %v477
    %v487 = vextract.low.u32 %v486
    %v488 = vextract.high.u32 %v486
    %v489 = vmul.u32 %v482, %v473
    %v490 = vadd.s32 %v485, %v487
    %vm491 = vc.u32 %v485, %v487
    %v492 = vadd.s32 %v488, 1
    %v493 = vsel %vm491, %v492, %v488
    %v494 = vadd.s32 %v489, %v493
    %v495 = vadd.s32 %v494, 536870912
    %v496 = vshrl.u32 %v495, 30
    %v497 = vshll.u32 %v496, 30
    %v498 = vsub.s32 %v494, %v497
    %vm499 = vcmp.lt.s32.totalorder %v498, 0
    %v500 = vsub.s32 0, %v498
    %v501 = vsel %vm499, %v500, %v498
    %v502 = vclz %v501
    %v503 = vsub.s32 %v502, 2
    %vm504 = vcmp.gt.s32.totalorder 0, %v503
    %v505 = vsel %vm504, 0, %v503
    %v506 = vsub.s32 32, %v505
    %v507 = vshll.u32 %v498, %v505
    %v508 = vshrl.u32 %v490, %v506
    %v509 = vor.u32 %v507, %v508
    %v510 = vsub.s32 4294967266, %v505
    %v511 = vadd.s32 %v510, 127
    %v512 = vshll.u32 %v511, 23
    %v513 = vor.u32 4788187, %v512
    %v514 = vand.u32 2147483647, %v513
    %v516 = vcvt.s32.f32 %v509
    %v517 = vmul.f32 %v516, %v514
    %v518 = vxor.u32 %v517, 2147483648
    %v519 = vsel %vm436, %v518, %v517
    %v520 = vsub.s32 4, %v496
    %v521 = vsel %vm436, %v520, %v496
    %v522 = vsel %vm435, %v121, %v519
    %v523 = vsel %vm435, 0, %v521
    %v524 = vcosq.f32.pop %v522
    %v525 = vsinq.f32.pop %v522
    %vm526 = vweird.f32 %v121
    %v527 = vadd.s32 %v523, 3
    %v528 = vand.u32 %v527, 3
    %vm529 = vcmp.lt.s32.totalorder %v528, 2
    %vm530 = vcmp.eq.s32.totalorder %v528, 0
    %v531 = vxor.u32 %v525, 2147483648
    %v532 = vsel %vm530, %v524, %v531
    %vm533 = vcmp.eq.s32.totalorder %v528, 2
    %v534 = vxor.u32 %v524, 2147483648
    %v535 = vsel %vm533, %v534, %v525
    %v536 = vsel %vm529, %v532, %v535
    %v537 = vsel %vm526, nan, %v536
    %v538 = vld [vmem:[%s3] sm:$0xff]
    %v539 = vld [vmem:[%s3 + $0x8] sm:$0xff]
    %v540 = vld [vmem:[%s3 + $0x10] sm:$0xff]
    %v541 = vld [vmem:[%s3 + $0x18] sm:$0xff]
    %v542 = vld [vmem:[%s4] sm:$0xff]
    %v543 = vld [vmem:[%s4 + $0x8] sm:$0xff]
    %v544 = vld [vmem:[%s4 + $0x10] sm:$0xff]
    %v545 = vld [vmem:[%s4 + $0x18] sm:$0xff]
    %547 = vset.pattern.permute.xlu0 0
    %548 = vperm.xlu0 %547, %v542
    %v549 = vpop.permute.xlu0 %548
    %552 = vset.pattern.permute.xlu0 0
    %553 = vperm.xlu0 %552, %v543
    %v554 = vpop.permute.xlu0 %553
    %557 = vset.pattern.permute.xlu0 0
    %558 = vperm.xlu0 %557, %v544
    %v559 = vpop.permute.xlu0 %558
    %562 = vset.pattern.permute.xlu0 0
    %563 = vperm.xlu0 %562, %v545
    %v564 = vpop.permute.xlu0 %563
    %vm566 = vcmask 261120
    %v568 = vsel %vm566, %v538, 0
    %v571 = vsel %vm566, %v539, 0
    %v574 = vsel %vm566, %v540, 0
    %v577 = vsel %vm566, %v541, 0
    %579 = vmatprep.subr.mxu0 0.0
    %580 = vmatpush1.msra.mxu0 %v225
    %581 = vmatprep.subr.mxu0 0.0
    %582 = vmatpush1.msra.mxu0 %v329
    %583 = vmatprep.subr.mxu0 0.0
    %584 = vmatpush1.msra.mxu0 %v433
    %585 = vmatprep.subr.mxu0 0.0
    %586 = vmatpush1.msra.mxu0 %v537
    %587 = vmatprep.subr.mxu0 0.0
    %588 = vmatpush1.msra.mxu0 0.0
    %589 = vmatprep.subr.mxu0 0.0
    %590 = vmatpush1.msra.mxu0 0.0
    %591 = vmatprep.subr.mxu0 0.0
    %592 = vmatpush1.msra.mxu0 0.0
    %593 = vmatprep.subr.mxu0 0.0
    %594 = vmatpush1.msra.mxu0 0.0
    %595 = vmatprep.subr.mxu0 0.0
    %596 = vmatpush1.msra.mxu0 0.0
    %597 = vmatprep.subr.mxu0 0.0
    %598 = vmatpush1.msra.mxu0 0.0
    %599 = vmatprep.subr.mxu0 0.0
    %600 = vmatpush1.msra.mxu0 0.0
    %601 = vmatprep.subr.mxu0 0.0
    %602 = vmatpush1.msra.mxu0 0.0
    %603 = vmatprep.subr.mxu0 0.0
    %604 = vmatpush1.msra.mxu0 0.0
    %605 = vmatprep.subr.mxu0 0.0
    %606 = vmatpush1.msra.mxu0 0.0
    %607 = vmatprep.subr.mxu0 0.0
    %608 = vmatpush1.msra.mxu0 0.0
    %609 = vmatprep.subr.mxu0 0.0
    %610 = vmatpush1.msra.mxu0 0.0
    %611 = vmatprep.subr.mxu0 0.0
    %612 = vmatpush1.msra.mxu0 0.0
    %613 = vmatprep.subr.mxu0 0.0
    %614 = vmatpush1.msra.mxu0 0.0
    %615 = vmatprep.subr.mxu0 0.0
    %616 = vmatpush1.msra.mxu0 0.0
    %617 = vmatprep.subr.mxu0 0.0
    %618 = vmatpush1.msra.mxu0 0.0
    %619 = vmatprep.subr.mxu0 0.0
    %620 = vmatpush1.msra.mxu0 0.0
    %621 = vmatprep.subr.mxu0 0.0
    %622 = vmatpush1.msra.mxu0 0.0
    %623 = vmatprep.subr.mxu0 0.0
    %624 = vmatpush1.msra.mxu0 0.0
    %625 = vmatprep.subr.mxu0 0.0
    %626 = vmatpush1.msra.mxu0 0.0
    %627 = vmatprep.subr.mxu0 0.0
    %628 = vmatpush1.msra.mxu0 0.0
    %629 = vmatprep.subr.mxu0 0.0
    %630 = vmatpush1.msra.mxu0 0.0
    %631 = vmatprep.subr.mxu0 0.0
    %632 = vmatpush1.msra.mxu0 0.0
    %633 = vmatprep.subr.mxu0 0.0
    %634 = vmatpush1.msra.mxu0 0.0
    %635 = vmatprep.subr.mxu0 0.0
    %636 = vmatpush1.msra.mxu0 0.0
    %637 = vmatprep.subr.mxu0 0.0
    %638 = vmatpush1.msra.mxu0 0.0
    %639 = vmatprep.subr.mxu0 0.0
    %640 = vmatpush1.msra.mxu0 0.0
    %641 = vmatprep.subr.mxu0 0.0
    %642 = vmatpush1.msra.mxu0 0.0
    %643 = vmatprep.mubr.f32.mxu0 0.0
    %644 = vmatmul.mubr.f32.gmra.mrb[0].mxu0 %v568
    %v645 = vpop.f32.mrb[0].mxu0
    %v646 = vadd.f32 %v549, %v645
    %v647 = vpop.f32.mrb[0].mxu0
    %648 = vmatprep.mubr.f32.mxu0 0.0
    %649 = vmatmul.mubr.f32.gmra.mrb[0].mxu0 %v571
    %v650 = vpop.f32.mrb[0].mxu0
    %v651 = vadd.f32 %v554, %v650
    %v652 = vpop.f32.mrb[0].mxu0
    %653 = vmatprep.mubr.f32.mxu0 0.0
    %654 = vmatmul.mubr.f32.gmra.mrb[0].mxu0 %v574
    %v655 = vpop.f32.mrb[0].mxu0
    %v656 = vadd.f32 %v559, %v655
    %v657 = vpop.f32.mrb[0].mxu0
    %658 = vmatprep.mubr.f32.mxu0 0.0
    %659 = vmatmul.mubr.f32.gmra.mrb[0].mxu0 %v577
    %v660 = vpop.f32.mrb[0].mxu0
    %v661 = vadd.f32 %v564, %v660
    %v662 = vpop.f32.mrb[0].mxu0
    %663 = vdwg.mxu0
    %v664 = vand.u32 2147483647, %v646
    %vm665 = vcmp.le.f32.partialorder %v664, 0.7853982
    %vm666 = vcmp.lt.s32.totalorder %v646, 0
    %v667 = vand.u32 %v646, 2139095040
    %v668 = vshrl.u32 %v667, 23
    %v669 = vsub.s32 %v668, 127
    %v670 = vand.u32 2147483647, %v646
    %v671 = vand.u32 %v670, 8388607
    %v672 = vor.u32 %v671, 8388608
    %v673 = vsub.s32 0, %v672
    %v674 = vadd.s32 %v669, 1
    %vm675 = vcmp.gt.s32.totalorder %v674, 0
    %v676 = vsel %vm675, %v674, 0
    %v677 = vshrl.u32 %v676, 5
    %v678 = vand.u32 %v676, 31
    %v679 = vsub.s32 32, %v678
    %v680 = vshrl.u32 683565275, %v679
    %v681 = vshll.u32 683565275, %v678
    %v682 = vshrl.u32 2475754826, %v679
    %v683 = vor.u32 %v681, %v682
    %v684 = vshll.u32 2475754826, %v678
    %v685 = vshrl.u32 2131351028, %v679
    %v686 = vor.u32 %v684, %v685
    %v687 = vshll.u32 2131351028, %v678
    %v688 = vshrl.u32 2102212464, %v679
    %v689 = vor.u32 %v687, %v688
    %v690 = vshll.u32 2102212464, %v678
    %v691 = vshrl.u32 920167782, %v679
    %v692 = vor.u32 %v690, %v691
    %v693 = vshll.u32 920167782, %v678
    %v694 = vshrl.u32 1326507024, %v679
    %v695 = vor.u32 %v693, %v694
    %vm696 = vcmp.lt.s32.totalorder %v677, 1
    %vm697 = vcmp.lt.s32.totalorder %v677, 2
    %vm698 = vcmp.lt.s32.totalorder %v677, 3
    %vm699 = vcmp.lt.s32.totalorder %v677, 4
    %v700 = vsel %vm696, %v680, %v683
    %v701 = vsel %vm699, %v689, 2102212464
    %v702 = vsel %vm698, %v686, %v701
    %v703 = vsel %vm697, %v700, %v702
    %v704 = vsel %vm696, %v683, %v686
    %v705 = vsel %vm699, %v692, 920167782
    %v706 = vsel %vm698, %v689, %v705
    %v707 = vsel %vm697, %v704, %v706
    %v708 = vsel %vm696, %v686, %v689
    %v709 = vsel %vm699, %v695, 1326507024
    %v710 = vsel %vm698, %v692, %v709
    %v711 = vsel %vm697, %v708, %v710
    %v712 = vshll.u32 %v672, 8
    %v713 = vmul.u32.u64.compose %v712, %v711
    %v714 = vextract.low.u32 %v713
    %v715 = vextract.high.u32 %v713
    %v716 = vmul.u32.u64.compose %v712, %v707
    %v717 = vextract.low.u32 %v716
    %v718 = vextract.high.u32 %v716
    %v719 = vmul.u32 %v712, %v703
    %v720 = vadd.s32 %v715, %v717
    %vm721 = vc.u32 %v715, %v717
    %v722 = vadd.s32 %v718, 1
    %v723 = vsel %vm721, %v722, %v718
    %v724 = vadd.s32 %v719, %v723
    %v725 = vadd.s32 %v724, 536870912
    %v726 = vshrl.u32 %v725, 30
    %v727 = vshll.u32 %v726, 30
    %v728 = vsub.s32 %v724, %v727
    %vm729 = vcmp.lt.s32.totalorder %v728, 0
    %v730 = vsub.s32 0, %v728
    %v731 = vsel %vm729, %v730, %v728
    %v732 = vclz %v731
    %v733 = vsub.s32 %v732, 2
    %vm734 = vcmp.gt.s32.totalorder 0, %v733
    %v735 = vsel %vm734, 0, %v733
    %v736 = vsub.s32 32, %v735
    %v737 = vshll.u32 %v728, %v735
    %v738 = vshrl.u32 %v720, %v736
    %v739 = vor.u32 %v737, %v738
    %v740 = vsub.s32 4294967266, %v735
    %v741 = vadd.s32 %v740, 127
    %v742 = vshll.u32 %v741, 23
    %v743 = vor.u32 4788187, %v742
    %v744 = vand.u32 2147483647, %v743
    %v746 = vcvt.s32.f32 %v739
    %v747 = vmul.f32 %v746, %v744
    %v748 = vxor.u32 %v747, 2147483648
    %v749 = vsel %vm666, %v748, %v747
    %v750 = vsub.s32 4, %v726
    %v751 = vsel %vm666, %v750, %v726
    %v752 = vsel %vm665, %v646, %v749
    %v753 = vsel %vm665, 0, %v751
    %v754 = vcosq.f32.pop %v752
    %v755 = vsinq.f32.pop %v752
    %vm756 = vweird.f32 %v646
    %v757 = vadd.s32 %v753, 3
    %v758 = vand.u32 %v757, 3
    %vm759 = vcmp.lt.s32.totalorder %v758, 2
    %vm760 = vcmp.eq.s32.totalorder %v758, 0
    %v761 = vxor.u32 %v755, 2147483648
    %v762 = vsel %vm760, %v754, %v761
    %vm763 = vcmp.eq.s32.totalorder %v758, 2
    %v764 = vxor.u32 %v754, 2147483648
    %v765 = vsel %vm763, %v764, %v755
    %v766 = vsel %vm759, %v762, %v765
    %v767 = vsel %vm756, nan, %v766
    %v768 = vand.u32 2147483647, %v651
    %vm769 = vcmp.le.f32.partialorder %v768, 0.7853982
    %vm770 = vcmp.lt.s32.totalorder %v651, 0
    %v771 = vand.u32 %v651, 2139095040
    %v772 = vshrl.u32 %v771, 23
    %v773 = vsub.s32 %v772, 127
    %v774 = vand.u32 2147483647, %v651
    %v775 = vand.u32 %v774, 8388607
    %v776 = vor.u32 %v775, 8388608
    %v777 = vsub.s32 0, %v776
    %v778 = vadd.s32 %v773, 1
    %vm779 = vcmp.gt.s32.totalorder %v778, 0
    %v780 = vsel %vm779, %v778, 0
    %v781 = vshrl.u32 %v780, 5
    %v782 = vand.u32 %v780, 31
    %v783 = vsub.s32 32, %v782
    %v784 = vshrl.u32 683565275, %v783
    %v785 = vshll.u32 683565275, %v782
    %v786 = vshrl.u32 2475754826, %v783
    %v787 = vor.u32 %v785, %v786
    %v788 = vshll.u32 2475754826, %v782
    %v789 = vshrl.u32 2131351028, %v783
    %v790 = vor.u32 %v788, %v789
    %v791 = vshll.u32 2131351028, %v782
    %v792 = vshrl.u32 2102212464, %v783
    %v793 = vor.u32 %v791, %v792
    %v794 = vshll.u32 2102212464, %v782
    %v795 = vshrl.u32 920167782, %v783
    %v796 = vor.u32 %v794, %v795
    %v797 = vshll.u32 920167782, %v782
    %v798 = vshrl.u32 1326507024, %v783
    %v799 = vor.u32 %v797, %v798
    %vm800 = vcmp.lt.s32.totalorder %v781, 1
    %vm801 = vcmp.lt.s32.totalorder %v781, 2
    %vm802 = vcmp.lt.s32.totalorder %v781, 3
    %vm803 = vcmp.lt.s32.totalorder %v781, 4
    %v804 = vsel %vm800, %v784, %v787
    %v805 = vsel %vm803, %v793, 2102212464
    %v806 = vsel %vm802, %v790, %v805
    %v807 = vsel %vm801, %v804, %v806
    %v808 = vsel %vm800, %v787, %v790
    %v809 = vsel %vm803, %v796, 920167782
    %v810 = vsel %vm802, %v793, %v809
    %v811 = vsel %vm801, %v808, %v810
    %v812 = vsel %vm800, %v790, %v793
    %v813 = vsel %vm803, %v799, 1326507024
    %v814 = vsel %vm802, %v796, %v813
    %v815 = vsel %vm801, %v812, %v814
    %v816 = vshll.u32 %v776, 8
    %v817 = vmul.u32.u64.compose %v816, %v815
    %v818 = vextract.low.u32 %v817
    %v819 = vextract.high.u32 %v817
    %v820 = vmul.u32.u64.compose %v816, %v811
    %v821 = vextract.low.u32 %v820
    %v822 = vextract.high.u32 %v820
    %v823 = vmul.u32 %v816, %v807
    %v824 = vadd.s32 %v819, %v821
    %vm825 = vc.u32 %v819, %v821
    %v826 = vadd.s32 %v822, 1
    %v827 = vsel %vm825, %v826, %v822
    %v828 = vadd.s32 %v823, %v827
    %v829 = vadd.s32 %v828, 536870912
    %v830 = vshrl.u32 %v829, 30
    %v831 = vshll.u32 %v830, 30
    %v832 = vsub.s32 %v828, %v831
    %vm833 = vcmp.lt.s32.totalorder %v832, 0
    %v834 = vsub.s32 0, %v832
    %v835 = vsel %vm833, %v834, %v832
    %v836 = vclz %v835
    %v837 = vsub.s32 %v836, 2
    %vm838 = vcmp.gt.s32.totalorder 0, %v837
    %v839 = vsel %vm838, 0, %v837
    %v840 = vsub.s32 32, %v839
    %v841 = vshll.u32 %v832, %v839
    %v842 = vshrl.u32 %v824, %v840
    %v843 = vor.u32 %v841, %v842
    %v844 = vsub.s32 4294967266, %v839
    %v845 = vadd.s32 %v844, 127
    %v846 = vshll.u32 %v845, 23
    %v847 = vor.u32 4788187, %v846
    %v848 = vand.u32 2147483647, %v847
    %v850 = vcvt.s32.f32 %v843
    %v851 = vmul.f32 %v850, %v848
    %v852 = vxor.u32 %v851, 2147483648
    %v853 = vsel %vm770, %v852, %v851
    %v854 = vsub.s32 4, %v830
    %v855 = vsel %vm770, %v854, %v830
    %v856 = vsel %vm769, %v651, %v853
    %v857 = vsel %vm769, 0, %v855
    %v858 = vcosq.f32.pop %v856
    %v859 = vsinq.f32.pop %v856
    %vm860 = vweird.f32 %v651
    %v861 = vadd.s32 %v857, 3
    %v862 = vand.u32 %v861, 3
    %vm863 = vcmp.lt.s32.totalorder %v862, 2
    %vm864 = vcmp.eq.s32.totalorder %v862, 0
    %v865 = vxor.u32 %v859, 2147483648
    %v866 = vsel %vm864, %v858, %v865
    %vm867 = vcmp.eq.s32.totalorder %v862, 2
    %v868 = vxor.u32 %v858, 2147483648
    %v869 = vsel %vm867, %v868, %v859
    %v870 = vsel %vm863, %v866, %v869
    %v871 = vsel %vm860, nan, %v870
    %v872 = vand.u32 2147483647, %v656
    %vm873 = vcmp.le.f32.partialorder %v872, 0.7853982
    %vm874 = vcmp.lt.s32.totalorder %v656, 0
    %v875 = vand.u32 %v656, 2139095040
    %v876 = vshrl.u32 %v875, 23
    %v877 = vsub.s32 %v876, 127
    %v878 = vand.u32 2147483647, %v656
    %v879 = vand.u32 %v878, 8388607
    %v880 = vor.u32 %v879, 8388608
    %v881 = vsub.s32 0, %v880
    %v882 = vadd.s32 %v877, 1
    %vm883 = vcmp.gt.s32.totalorder %v882, 0
    %v884 = vsel %vm883, %v882, 0
    %v885 = vshrl.u32 %v884, 5
    %v886 = vand.u32 %v884, 31
    %v887 = vsub.s32 32, %v886
    %v888 = vshrl.u32 683565275, %v887
    %v889 = vshll.u32 683565275, %v886
    %v890 = vshrl.u32 2475754826, %v887
    %v891 = vor.u32 %v889, %v890
    %v892 = vshll.u32 2475754826, %v886
    %v893 = vshrl.u32 2131351028, %v887
    %v894 = vor.u32 %v892, %v893
    %v895 = vshll.u32 2131351028, %v886
    %v896 = vshrl.u32 2102212464, %v887
    %v897 = vor.u32 %v895, %v896
    %v898 = vshll.u32 2102212464, %v886
    %v899 = vshrl.u32 920167782, %v887
    %v900 = vor.u32 %v898, %v899
    %v901 = vshll.u32 920167782, %v886
    %v902 = vshrl.u32 1326507024, %v887
    %v903 = vor.u32 %v901, %v902
    %vm904 = vcmp.lt.s32.totalorder %v885, 1
    %vm905 = vcmp.lt.s32.totalorder %v885, 2
    %vm906 = vcmp.lt.s32.totalorder %v885, 3
    %vm907 = vcmp.lt.s32.totalorder %v885, 4
    %v908 = vsel %vm904, %v888, %v891
    %v909 = vsel %vm907, %v897, 2102212464
    %v910 = vsel %vm906, %v894, %v909
    %v911 = vsel %vm905, %v908, %v910
    %v912 = vsel %vm904, %v891, %v894
    %v913 = vsel %vm907, %v900, 920167782
    %v914 = vsel %vm906, %v897, %v913
    %v915 = vsel %vm905, %v912, %v914
    %v916 = vsel %vm904, %v894, %v897
    %v917 = vsel %vm907, %v903, 1326507024
    %v918 = vsel %vm906, %v900, %v917
    %v919 = vsel %vm905, %v916, %v918
    %v920 = vshll.u32 %v880, 8
    %v921 = vmul.u32.u64.compose %v920, %v919
    %v922 = vextract.low.u32 %v921
    %v923 = vextract.high.u32 %v921
    %v924 = vmul.u32.u64.compose %v920, %v915
    %v925 = vextract.low.u32 %v924
    %v926 = vextract.high.u32 %v924
    %v927 = vmul.u32 %v920, %v911
    %v928 = vadd.s32 %v923, %v925
    %vm929 = vc.u32 %v923, %v925
    %v930 = vadd.s32 %v926, 1
    %v931 = vsel %vm929, %v930, %v926
    %v932 = vadd.s32 %v927, %v931
    %v933 = vadd.s32 %v932, 536870912
    %v934 = vshrl.u32 %v933, 30
    %v935 = vshll.u32 %v934, 30
    %v936 = vsub.s32 %v932, %v935
    %vm937 = vcmp.lt.s32.totalorder %v936, 0
    %v938 = vsub.s32 0, %v936
    %v939 = vsel %vm937, %v938, %v936
    %v940 = vclz %v939
    %v941 = vsub.s32 %v940, 2
    %vm942 = vcmp.gt.s32.totalorder 0, %v941
    %v943 = vsel %vm942, 0, %v941
    %v944 = vsub.s32 32, %v943
    %v945 = vshll.u32 %v936, %v943
    %v946 = vshrl.u32 %v928, %v944
    %v947 = vor.u32 %v945, %v946
    %v948 = vsub.s32 4294967266, %v943
    %v949 = vadd.s32 %v948, 127
    %v950 = vshll.u32 %v949, 23
    %v951 = vor.u32 4788187, %v950
    %v952 = vand.u32 2147483647, %v951
    %v954 = vcvt.s32.f32 %v947
    %v955 = vmul.f32 %v954, %v952
    %v956 = vxor.u32 %v955, 2147483648
    %v957 = vsel %vm874, %v956, %v955
    %v958 = vsub.s32 4, %v934
    %v959 = vsel %vm874, %v958, %v934
    %v960 = vsel %vm873, %v656, %v957
    %v961 = vsel %vm873, 0, %v959
    %v962 = vcosq.f32.pop %v960
    %v963 = vsinq.f32.pop %v960
    %vm964 = vweird.f32 %v656
    %v965 = vadd.s32 %v961, 3
    %v966 = vand.u32 %v965, 3
    %vm967 = vcmp.lt.s32.totalorder %v966, 2
    %vm968 = vcmp.eq.s32.totalorder %v966, 0
    %v969 = vxor.u32 %v963, 2147483648
    %v970 = vsel %vm968, %v962, %v969
    %vm971 = vcmp.eq.s32.totalorder %v966, 2
    %v972 = vxor.u32 %v962, 2147483648
    %v973 = vsel %vm971, %v972, %v963
    %v974 = vsel %vm967, %v970, %v973
    %v975 = vsel %vm964, nan, %v974
    %v976 = vand.u32 2147483647, %v661
    %vm977 = vcmp.le.f32.partialorder %v976, 0.7853982
    %vm978 = vcmp.lt.s32.totalorder %v661, 0
    %v979 = vand.u32 %v661, 2139095040
    %v980 = vshrl.u32 %v979, 23
    %v981 = vsub.s32 %v980, 127
    %v982 = vand.u32 2147483647, %v661
    %v983 = vand.u32 %v982, 8388607
    %v984 = vor.u32 %v983, 8388608
    %v985 = vsub.s32 0, %v984
    %v986 = vadd.s32 %v981, 1
    %vm987 = vcmp.gt.s32.totalorder %v986, 0
    %v988 = vsel %vm987, %v986, 0
    %v989 = vshrl.u32 %v988, 5
    %v990 = vand.u32 %v988, 31
    %v991 = vsub.s32 32, %v990
    %v992 = vshrl.u32 683565275, %v991
    %v993 = vshll.u32 683565275, %v990
    %v994 = vshrl.u32 2475754826, %v991
    %v995 = vor.u32 %v993, %v994
    %v996 = vshll.u32 2475754826, %v990
    %v997 = vshrl.u32 2131351028, %v991
    %v998 = vor.u32 %v996, %v997
    %v999 = vshll.u32 2131351028, %v990
    %v1000 = vshrl.u32 2102212464, %v991
    %v1001 = vor.u32 %v999, %v1000
    %v1002 = vshll.u32 2102212464, %v990
    %v1003 = vshrl.u32 920167782, %v991
    %v1004 = vor.u32 %v1002, %v1003
    %v1005 = vshll.u32 920167782, %v990
    %v1006 = vshrl.u32 1326507024, %v991
    %v1007 = vor.u32 %v1005, %v1006
    %vm1008 = vcmp.lt.s32.totalorder %v989, 1
    %vm1009 = vcmp.lt.s32.totalorder %v989, 2
    %vm1010 = vcmp.lt.s32.totalorder %v989, 3
    %vm1011 = vcmp.lt.s32.totalorder %v989, 4
    %v1012 = vsel %vm1008, %v992, %v995
    %v1013 = vsel %vm1011, %v1001, 2102212464
    %v1014 = vsel %vm1010, %v998, %v1013
    %v1015 = vsel %vm1009, %v1012, %v1014
    %v1016 = vsel %vm1008, %v995, %v998
    %v1017 = vsel %vm1011, %v1004, 920167782
    %v1018 = vsel %vm1010, %v1001, %v1017
    %v1019 = vsel %vm1009, %v1016, %v1018
    %v1020 = vsel %vm1008, %v998, %v1001
    %v1021 = vsel %vm1011, %v1007, 1326507024
    %v1022 = vsel %vm1010, %v1004, %v1021
    %v1023 = vsel %vm1009, %v1020, %v1022
    %v1024 = vshll.u32 %v984, 8
    %v1025 = vmul.u32.u64.compose %v1024, %v1023
    %v1026 = vextract.low.u32 %v1025
    %v1027 = vextract.high.u32 %v1025
    %v1028 = vmul.u32.u64.compose %v1024, %v1019
    %v1029 = vextract.low.u32 %v1028
    %v1030 = vextract.high.u32 %v1028
    %v1031 = vmul.u32 %v1024, %v1015
    %v1032 = vadd.s32 %v1027, %v1029
    %vm1033 = vc.u32 %v1027, %v1029
    %v1034 = vadd.s32 %v1030, 1
    %v1035 = vsel %vm1033, %v1034, %v1030
    %v1036 = vadd.s32 %v1031, %v1035
    %v1037 = vadd.s32 %v1036, 536870912
    %v1038 = vshrl.u32 %v1037, 30
    %v1039 = vshll.u32 %v1038, 30
    %v1040 = vsub.s32 %v1036, %v1039
    %vm1041 = vcmp.lt.s32.totalorder %v1040, 0
    %v1042 = vsub.s32 0, %v1040
    %v1043 = vsel %vm1041, %v1042, %v1040
    %v1044 = vclz %v1043
    %v1045 = vsub.s32 %v1044, 2
    %vm1046 = vcmp.gt.s32.totalorder 0, %v1045
    %v1047 = vsel %vm1046, 0, %v1045
    %v1048 = vsub.s32 32, %v1047
    %v1049 = vshll.u32 %v1040, %v1047
    %v1050 = vshrl.u32 %v1032, %v1048
    %v1051 = vor.u32 %v1049, %v1050
    %v1052 = vsub.s32 4294967266, %v1047
    %v1053 = vadd.s32 %v1052, 127
    %v1054 = vshll.u32 %v1053, 23
    %v1055 = vor.u32 4788187, %v1054
    %v1056 = vand.u32 2147483647, %v1055
    %v1058 = vcvt.s32.f32 %v1051
    %v1059 = vmul.f32 %v1058, %v1056
    %v1060 = vxor.u32 %v1059, 2147483648
    %v1061 = vsel %vm978, %v1060, %v1059
    %v1062 = vsub.s32 4, %v1038
    %v1063 = vsel %vm978, %v1062, %v1038
    %v1064 = vsel %vm977, %v661, %v1061
    %v1065 = vsel %vm977, 0, %v1063
    %v1066 = vcosq.f32.pop %v1064
    %v1067 = vsinq.f32.pop %v1064
    %vm1068 = vweird.f32 %v661
    %v1069 = vadd.s32 %v1065, 3
    %v1070 = vand.u32 %v1069, 3
    %vm1071 = vcmp.lt.s32.totalorder %v1070, 2
    %vm1072 = vcmp.eq.s32.totalorder %v1070, 0
    %v1073 = vxor.u32 %v1067, 2147483648
    %v1074 = vsel %vm1072, %v1066, %v1073
    %vm1075 = vcmp.eq.s32.totalorder %v1070, 2
    %v1076 = vxor.u32 %v1066, 2147483648
    %v1077 = vsel %vm1075, %v1076, %v1067
    %v1078 = vsel %vm1071, %v1074, %v1077
    %v1079 = vsel %vm1068, nan, %v1078
    %v1080 = vld [vmem:[%s5] sm:$0xff]
    %v1081 = vld [vmem:[%s5 + $0x8] sm:$0xff]
    %v1082 = vld [vmem:[%s5 + $0x10] sm:$0xff]
    %v1083 = vld [vmem:[%s5 + $0x18] sm:$0xff]
    %1085 = vset.pattern.permute.xlu0 0
    %1086 = vperm.xlu0 %1085, %v1080
    %v1087 = vpop.permute.xlu0 %1086
    %1090 = vset.pattern.permute.xlu0 0
    %1091 = vperm.xlu0 %1090, %v1081
    %v1092 = vpop.permute.xlu0 %1091
    %1095 = vset.pattern.permute.xlu0 0
    %1096 = vperm.xlu0 %1095, %v1082
    %v1097 = vpop.permute.xlu0 %1096
    %1100 = vset.pattern.permute.xlu0 0
    %1101 = vperm.xlu0 %1100, %v1083
    %v1102 = vpop.permute.xlu0 %1101
    %v1104 = vmul.f32 %v1087, %v767
    %v1105 = vmul.f32 %v1092, %v871
    %v1106 = vmul.f32 %v1097, %v975
    %v1107 = vmul.f32 %v1102, %v1079
    %v1108 = vadd.f32 %v1104, %v1105
    %v1109 = vadd.f32 %v1108, %v1106
    %v1110 = vadd.f32 %v1109, %v1107
    %v1111 = vrot.slane %v1110, 4
    %v1112 = vadd.f32 %v1110, %v1111
    %v1113 = vrot.slane %v1112, 2
    %v1114 = vadd.f32 %v1112, %v1113
    %v1115 = vrot.slane %v1114, 1
    %v1116 = vadd.f32 %v1114, %v1115
    %v1117 = vld [vmem:[#allocation2] sm:$0x1]
    %1119 = vset.pattern.permute.xlu0 0
    %1120 = vperm.xlu0 %1119, %v1117
    %v1121 = vpop.permute.xlu0 %1120
    %v1123 = vlaneseq
    %v1124 = vshrl.u32 %v1123, 7
    %v1125 = vsub.s32 0, %v1124
    %v1126 = vrot.slane %v1121, %v1125
    %v1127 = vadd.f32 %v1116, %v1126
    %v1128 = vlaneseq
    %v1129 = vand.u32 %v1128, 127
    %s1130 = smul.u32 0, 128
    %v1131 = vstv %s1130
    %v1132 = vadd.s32 %v1129, %v1131
    %vm1133 = vcmp.lt.s32.totalorder %v1132, 64
    %v1134 = vsel %vm1133, %v1127, 0.0
    %1135 = vst [vmem:[#allocation3] sm:$0x1] %v1134
    %v1136 = vmul.f32 %v1134, %v1134
    %vm1137 = vcmask 1040384
    %v1138 = vsel %vm1137, %v1136, 0.0
    %1139 = vadd.xlane.f32.xlu0 %v1138
    %v1140 = vpop.xlane.xlu0 %1139
    %v1141 = vrot.slane %v1140, 4
    %v1142 = vadd.f32 %v1140, %v1141
    %v1143 = vrot.slane %v1142, 2
    %v1144 = vadd.f32 %v1142, %v1143
    %v1145 = vrot.slane %v1144, 1
    %v1146 = vadd.f32 %v1144, %v1145
    %s1147 = vtos %v1146
    %v1148 = vstv %s1147
    %1149 = vst [vmem:[#allocation5] sm:$0xff] %v1148
    // Predicated region
    $region30: #{tpu_custom_call.1} parent=1 // pred_check
      _
    $region31: #{tpu_custom_call.1} parent=1 // pred_check_branch
      %1151 = sbr.rel (0) target = $region33
    $region32: #{tpu_custom_call.1} parent=1 // pred_region
      %s1153 = ssub.s32 16, 16
      %1154 = vsyncadd [#allocation4], %s1153
      %s1156 = sshll.u32 [#allocation3], 4
      %s1157 = int_to_ptr.vmem [resolvable:$true] %s1156
      %1159 = dma.vmem_to_hbm [thread:$0]  %s1157, 16, %s7, [#allocation4]
    $region33: #{tpu_custom_call.1} parent=1 // pred_fallthru
      _
    // Predicated region
    $region34: #{tpu_custom_call.1} parent=1 // pred_check
      _
    $region35: #{tpu_custom_call.1} parent=1 // pred_check_branch
      %1161 = sbr.rel (0) target = $region37
    $region36: #{tpu_custom_call.1} parent=1 // pred_region
      %s1163 = ssub.s32 128, 128
      %1164 = vsyncadd [#allocation6], %s1163
      %s1166 = sshll.u32 [#allocation5], 4
      %s1167 = int_to_ptr.vmem [resolvable:$true] %s1166
      %1169 = dma.vmem_to_hbm [thread:$0]  %s1167, 128, %s8, [#allocation6]
    $region37: #{tpu_custom_call.1} parent=1 // pred_fallthru
      _
    // Predicated region
    $region38: #{tpu_custom_call.1} parent=1 // pred_check
      _
    $region39: #{tpu_custom_call.1} parent=1 // pred_check_branch
      %1171 = sbr.rel (0) target = $region41
    $region40: #{tpu_custom_call.1} parent=1 // pred_region
      %1172 = dma.done [#allocation4], 16
    $region41: #{tpu_custom_call.1} parent=1 // pred_fallthru
      _
    // Predicated region
    $region42: #{tpu_custom_call.1} parent=1 // pred_check
      _
    $region43: #{tpu_custom_call.1} parent=1 // pred_check_branch
      %1174 = sbr.rel (0) target = $region45
    $region44: #{tpu_custom_call.1} parent=1 // pred_region
      %1175 = dma.done [#allocation6], 128
    $region45: #{tpu_custom_call.1} parent=1 // pred_fallthru
      _
    %1176 = vsyncpa [#allocation4], 1
    %1177 = vsyncpa [#allocation6], 1

</llo_original>
